<compile_context>
chip_gen: v5e
topology: v5e:2x2
jax: 0.10.0
libtpu: 0.0.40
codegen_flags: <defaults>
</compile_context>

<pallas_src>
import functools
import math

import jax
import jax.numpy as jnp
from jax.experimental import pallas as pl
from jax.experimental.pallas import tpu as pltpu

NEG_SLOPE = 0.2  # LeakyReLU(0.2)


def _round_up(x, m):
    return ((x + m - 1) // m) * m


# ----------------------------- Pallas kernel --------------------------------

def _mapping_kernel(x_ref, w1_ref, b1_ref, w2_ref, b2_ref, w3_ref, b3_ref,
                    o_ref, acc_ref, *, hw_total, hw_tile, mask_tail):
    # Grid: (batch_tiles, spatial_tiles); spatial axis is the reduction.
    s = pl.program_id(1)

    @pl.when(s == 0)
    def _():
        acc_ref[...] = jnp.zeros_like(acc_ref)

    # x block is (bn, C, hw_tile); HW is lane-dense.  Accumulate spatial sum
    # in f32 (stable stats regardless of input dtype).
    x = x_ref[...].astype(jnp.float32)
    if mask_tail:
        # Zero out-of-range spatial columns on the last (partial) tile.
        col = jax.lax.broadcasted_iota(jnp.int32, x.shape, 2)
        x = jnp.where(col < (hw_total - s * hw_tile), x, 0.0)
    acc_ref[...] += jnp.sum(x, axis=-1)          # XLU lane-reduce -> (bn, C)

    @pl.when(s == pl.num_programs(1) - 1)
    def _():
        # 1/HW is folded into w1 by the wrapper, so acc (the raw sum) feeds
        # the MLP directly.
        z = acc_ref[...]

        def leaky(v):
            return jnp.where(v > 0, v, NEG_SLOPE * v)

        h = leaky(jnp.dot(z, w1_ref[...],
                          preferred_element_type=jnp.float32) + b1_ref[...])
        h = leaky(jnp.dot(h, w2_ref[...],
                          preferred_element_type=jnp.float32) + b2_ref[...])
        h = jnp.dot(h, w3_ref[...],
                    preferred_element_type=jnp.float32) + b3_ref[...]
        o_ref[...] = h.astype(o_ref.dtype)


# ------------------------------ wrapper --------------------------------------

def mapping_network_forward(features_nchw, params, *, hw_tile=512):
    N, C, H, W = features_nchw.shape
    HW = H * W
    hid = params["w1"].shape[1]
    out_dim = params["w3"].shape[1]
    itemsize = jnp.dtype(features_nchw.dtype).itemsize

    # (N, C, H, W) -> (N, C, H*W): a free view, no HBM data movement, native dtype.
    x = features_nchw.reshape(N, C, HW)

    # --- batch tiling ---------------------------------------------------------
    BN_CAP = 256
    bn_tile = min(N, BN_CAP)
    # v7x has 2 TensorCores sharing HBM bandwidth: make sure the "parallel"
    # batch axis has at least 2 tiles whenever N >= 2 (harmless on v5e/v6e).
    if N >= 2 and pl.cdiv(N, bn_tile) < 2:
        bn_tile = pl.cdiv(N, 2)
    n_batch_tiles = pl.cdiv(N, bn_tile)

    # --- spatial tiling (lane axis) -------------------------------------------
    LANE = 128
    padded_c = _round_up(C, 8)                       # sublane padding of the block
    per_buf_budget = 8 * 1024 * 1024                 # per x-buffer (x2 double-buffer)
    if HW <= LANE:
        hw_tile_eff = HW                             # full-dim block (always legal)
    else:
        bytes_per_128cols = bn_tile * padded_c * LANE * itemsize
        cap = max(1, per_buf_budget // max(1, bytes_per_128cols)) * LANE
        req = max(LANE, (hw_tile // LANE) * LANE)
        hw_tile_eff = min(req, cap, _round_up(HW, LANE))
    n_hw_tiles = pl.cdiv(HW, hw_tile_eff)
    mask_tail = (HW % hw_tile_eff) != 0              # ragged tail handled in-kernel

    # --- parameters (f32 matmuls: MLP is negligible vs. mem-bound pooling) ----
    w1 = (params["w1"] * (1.0 / float(HW))).astype(jnp.float32)  # fold mean's 1/HW
    w2 = params["w2"].astype(jnp.float32)
    w3 = params["w3"].astype(jnp.float32)
    b1 = params["b1"].reshape(1, hid).astype(jnp.float32)
    b2 = params["b2"].reshape(1, hid).astype(jnp.float32)
    b3 = params["b3"].reshape(1, out_dim).astype(jnp.float32)

    # --- VMEM budget (lane-padded bytes) & cost estimate -----------------------
    x_block_bytes = bn_tile * padded_c * hw_tile_eff * itemsize
    weight_bytes = (C * hid + hid * hid + hid * out_dim + 2 * hid + out_dim) * 4
    vmem_limit = int(min(48 * 1024 * 1024,                       # < v7x 64 MiB physical
                         max(32 * 1024 * 1024,
                             2 * x_block_bytes + weight_bytes + (1 << 20))))
    cost = pl.CostEstimate(
        flops=int(N * HW * C + 2 * N * (C * hid + hid * hid + hid * out_dim)),
        transcendentals=0,
        bytes_accessed=int(N * HW * C * itemsize + weight_bytes + N * out_dim * 4),
    )

    kernel = functools.partial(_mapping_kernel, hw_total=HW, hw_tile=hw_tile_eff,
                               mask_tail=mask_tail)

    # Output is (batch_tiles, bn_tile, out_dim) with a squeezed leading block
    # dim, so the block's last two dims always equal the full array dims
    # regardless of bn_tile (robust for any N).
    out = pl.pallas_call(
        kernel,
        out_shape=jax.ShapeDtypeStruct((n_batch_tiles, bn_tile, out_dim),
                                       jnp.float32),
        grid_spec=pltpu.PrefetchScalarGridSpec(
            num_scalar_prefetch=0,
            grid=(n_batch_tiles, n_hw_tiles),
            in_specs=[
                pl.BlockSpec((bn_tile, C, hw_tile_eff), lambda b, s: (b, 0, s)),
                pl.BlockSpec((C, hid),        lambda b, s: (0, 0)),
                pl.BlockSpec((1, hid),        lambda b, s: (0, 0)),
                pl.BlockSpec((hid, hid),      lambda b, s: (0, 0)),
                pl.BlockSpec((1, hid),        lambda b, s: (0, 0)),
                pl.BlockSpec((hid, out_dim),  lambda b, s: (0, 0)),
                pl.BlockSpec((1, out_dim),    lambda b, s: (0, 0)),
            ],
            out_specs=pl.BlockSpec((None, bn_tile, out_dim),
                                   lambda b, s: (b, 0, 0)),
            scratch_shapes=[pltpu.VMEM((bn_tile, C), jnp.float32)],
        ),
        compiler_params=pltpu.CompilerParams(
            dimension_semantics=("parallel", "arbitrary"),
            vmem_limit_bytes=vmem_limit),
        cost_estimate=cost,
    )(x, w1, b1, w2, b2, w3, b3)

    return out.reshape(n_batch_tiles * bn_tile, out_dim)[:N]


# ---------------------------- parameters -------------------------------------

def init_params(key, z_dim, hidden_dim, output_dim):
    # Weights stored as (fan_in, fan_out) == PyTorch weight.T; y = x @ W + b.
    ks = jax.random.split(key, 6)

    def kaiming_leaky(k, fan_in, fan_out, a=NEG_SLOPE):
        std = math.sqrt(2.0 / ((1.0 + a * a) * fan_in))     # kaiming_normal_, fan_in
        return jax.random.normal(k, (fan_in, fan_out), jnp.float32) * std

    def linear_bias(k, fan_in, fan_out):
        bound = 1.0 / math.sqrt(fan_in)                      # PyTorch Linear default
        return jax.random.uniform(k, (1, fan_out), jnp.float32, -bound, bound)

    return {
        "w1": kaiming_leaky(ks[0], z_dim, hidden_dim),
        "b1": linear_bias(ks[1], z_dim, hidden_dim),
        "w2": kaiming_leaky(ks[2], hidden_dim, hidden_dim),
        "b2": linear_bias(ks[3], hidden_dim, hidden_dim),
        "w3": kaiming_leaky(ks[4], hidden_dim, output_dim) * 0.25,  # network[-1].weight *= 0.25
        "b3": linear_bias(ks[5], hidden_dim, output_dim),
    }


# ---------------------------- pure-JAX reference ------------------------------

def reference_forward(features_nchw, params):
    z = jnp.mean(features_nchw.astype(jnp.float32), axis=(2, 3))  # AdaptiveAvgPool2d((1,1))

    def leaky(v):
        return jnp.where(v > 0, v, NEG_SLOPE * v)

    h = leaky(z @ params["w1"] + params["b1"])
    h = leaky(h @ params["w2"] + params["b2"])
    return h @ params["w3"] + params["b3"]


# -------------------------------- main ----------------------------------------

if __name__ == "__main__":
    key = jax.random.PRNGKey(0)
    k_x, k_p = jax.random.split(key)

    batch, z_dim, spatial = 2, 4, 16           # features: (N, C=z_dim, H, W)
    map_hidden_dim, map_output_dim = 32, 8

    features = jax.random.normal(k_x, (batch, z_dim, spatial, spatial), jnp.float32)
    params = init_params(k_p, z_dim, map_hidden_dim, map_output_dim)

    # hw_tile=128 -> two spatial grid steps (reduction path) and, with batch=2,
    # two parallel batch tiles (megacore path) are both exercised.
    fwd = jax.jit(functools.partial(mapping_network_forward, hw_tile=128))
    out = jax.block_until_ready(fwd(features, params))

    ref = reference_forward(features, params)

    assert out.shape == (batch, map_output_dim), out.shape
    assert bool(jnp.all(jnp.isfinite(out)))
    # f32 accumulation + f32 MLP: tight parity with the reference.
    assert bool(jnp.allclose(out, ref, atol=2e-3, rtol=2e-3)), \
        float(jnp.max(jnp.abs(out - ref)))
    print("KERNEL_OK")
</pallas_src>

<mosaic_0001>
module attributes {stable_mosaic.version = 11 : i64} {
  func.func @_mapping_kernel(%arg0: i32, %arg1: i32, %arg2: memref<1x4x128xf32, #tpu.memory_space<vmem>>, %arg3: memref<4x32xf32, #tpu.memory_space<vmem>>, %arg4: memref<1x32xf32, #tpu.memory_space<vmem>>, %arg5: memref<32x32xf32, #tpu.memory_space<vmem>>, %arg6: memref<1x32xf32, #tpu.memory_space<vmem>>, %arg7: memref<32x8xf32, #tpu.memory_space<vmem>>, %arg8: memref<1x8xf32, #tpu.memory_space<vmem>>, %arg9: memref<1x1x8xf32, #tpu.memory_space<vmem>>, %arg10: memref<1x4xf32, #tpu.memory_space<vmem>>) attributes {dimension_semantics = [#tpu.dimension_semantics<parallel>, #tpu.dimension_semantics<arbitrary>], iteration_bounds = array<i64: 2, 2>, scalar_prefetch = 0 : i64, scratch_operands = 1 : i64, tpu.core_type = #tpu.core_type<tc>, window_params = [{transform_indices = @transform_0, window_bounds = array<i64: 1, 4, 128>}, {pipeline_mode = #tpu.pipeline_mode<synchronous>, transform_indices = @transform_1, window_bounds = array<i64: 4, 32>}, {pipeline_mode = #tpu.pipeline_mode<synchronous>, transform_indices = @transform_2, window_bounds = array<i64: 1, 32>}, {pipeline_mode = #tpu.pipeline_mode<synchronous>, transform_indices = @transform_3, window_bounds = array<i64: 32, 32>}, {pipeline_mode = #tpu.pipeline_mode<synchronous>, transform_indices = @transform_4, window_bounds = array<i64: 1, 32>}, {pipeline_mode = #tpu.pipeline_mode<synchronous>, transform_indices = @transform_5, window_bounds = array<i64: 32, 8>}, {pipeline_mode = #tpu.pipeline_mode<synchronous>, transform_indices = @transform_6, window_bounds = array<i64: 1, 8>}, {transform_indices = @transform_7, window_bounds = array<i64: 1, 1, 8>}]} {
    %c0_i32 = arith.constant 0 : i32
    %0 = arith.cmpi eq, %arg1, %c0_i32 : i32
    %1 = arith.extui %0 : i1 to i32
    %c0_i32_0 = arith.constant 0 : i32
    %2 = arith.cmpi ne, %1, %c0_i32_0 : i32
    scf.if %2 {
      %cst_8 = arith.constant 0.000000e+00 : f32
      %11 = vector.broadcast %cst_8 : f32 to vector<1x4xf32>
      %c0_9 = arith.constant 0 : index
      %c0_10 = arith.constant 0 : index
      %12 = vector.load %arg10[%c0_9, %c0_10] : memref<1x4xf32, #tpu.memory_space<vmem>>, vector<1x4xf32>
      tpu.vector_store %arg10[%c0_9, %c0_10], %11 {strides = array<i32>} : memref<1x4xf32, #tpu.memory_space<vmem>>, vector<1x4xf32>,
    } else {
    }
    %c0 = arith.constant 0 : index
    %c0_1 = arith.constant 0 : index
    %c0_2 = arith.constant 0 : index
    %3 = vector.load %arg2[%c0, %c0_1, %c0_2] : memref<1x4x128xf32, #tpu.memory_space<vmem>>, vector<1x4x128xf32>
    %c0_3 = arith.constant 0 : index
    %c0_4 = arith.constant 0 : index
    %4 = vector.load %arg10[%c0_3, %c0_4] : memref<1x4xf32, #tpu.memory_space<vmem>>, vector<1x4xf32>
    %cst = arith.constant dense<0.000000e+00> : vector<1x4xf32>
    %5 = vector.multi_reduction <add>, %3, %cst [2] : vector<1x4x128xf32> to vector<1x4xf32>
    %6 = arith.addf %4, %5 : vector<1x4xf32>
    %c0_5 = arith.constant 0 : index
    %c0_6 = arith.constant 0 : index
    %7 = vector.load %arg10[%c0_5, %c0_6] : memref<1x4xf32, #tpu.memory_space<vmem>>, vector<1x4xf32>
    tpu.vector_store %arg10[%c0_5, %c0_6], %6 {strides = array<i32>} : memref<1x4xf32, #tpu.memory_space<vmem>>, vector<1x4xf32>,
    %c1_i32 = arith.constant 1 : i32
    %8 = arith.cmpi eq, %arg1, %c1_i32 : i32
    %9 = arith.extui %8 : i1 to i32
    %c0_i32_7 = arith.constant 0 : i32
    %10 = arith.cmpi ne, %9, %c0_i32_7 : i32
    scf.if %10 {
      %c0_8 = arith.constant 0 : index
      %c0_9 = arith.constant 0 : index
      %11 = vector.load %arg10[%c0_8, %c0_9] : memref<1x4xf32, #tpu.memory_space<vmem>>, vector<1x4xf32>
      %c0_10 = arith.constant 0 : index
      %c0_11 = arith.constant 0 : index
      %12 = vector.load %arg3[%c0_10, %c0_11] : memref<4x32xf32, #tpu.memory_space<vmem>>, vector<4x32xf32>
      %cst_12 = arith.constant dense<0.000000e+00> : vector<1x32xf32>
      %13 = tpu.matmul %11, %12, %cst_12 {dimension_numbers = #tpu.dot_dimension_numbers<[1], [0], [0], [1], [0, 0, 1, 1], [], []>} : vector<1x4xf32>, vector<4x32xf32>, vector<1x32xf32> -> vector<1x32xf32>
      %c0_13 = arith.constant 0 : index
      %c0_14 = arith.constant 0 : index
      %14 = vector.load %arg4[%c0_13, %c0_14] : memref<1x32xf32, #tpu.memory_space<vmem>>, vector<1x32xf32>
      %15 = arith.addf %13, %14 : vector<1x32xf32>
      %cst_15 = arith.constant 0.000000e+00 : f32
      %16 = vector.broadcast %cst_15 : f32 to vector<1x32xf32>
      %17 = arith.cmpf ogt, %15, %16 : vector<1x32xf32>
      %cst_16 = arith.constant 2.000000e-01 : f32
      %18 = vector.broadcast %cst_16 : f32 to vector<1x32xf32>
      %19 = arith.mulf %18, %15 : vector<1x32xf32>
      %20 = arith.select %17, %15, %19 : vector<1x32xi1>, vector<1x32xf32>
      %c0_17 = arith.constant 0 : index
      %c0_18 = arith.constant 0 : index
      %21 = vector.load %arg5[%c0_17, %c0_18] : memref<32x32xf32, #tpu.memory_space<vmem>>, vector<32x32xf32>
      %cst_19 = arith.constant dense<0.000000e+00> : vector<1x32xf32>
      %22 = tpu.matmul %20, %21, %cst_19 {dimension_numbers = #tpu.dot_dimension_numbers<[1], [0], [0], [1], [0, 0, 1, 1], [], []>} : vector<1x32xf32>, vector<32x32xf32>, vector<1x32xf32> -> vector<1x32xf32>
      %c0_20 = arith.constant 0 : index
      %c0_21 = arith.constant 0 : index
      %23 = vector.load %arg6[%c0_20, %c0_21] : memref<1x32xf32, #tpu.memory_space<vmem>>, vector<1x32xf32>
      %24 = arith.addf %22, %23 : vector<1x32xf32>
      %cst_22 = arith.constant 0.000000e+00 : f32
      %25 = vector.broadcast %cst_22 : f32 to vector<1x32xf32>
      %26 = arith.cmpf ogt, %24, %25 : vector<1x32xf32>
      %cst_23 = arith.constant 2.000000e-01 : f32
      %27 = vector.broadcast %cst_23 : f32 to vector<1x32xf32>
      %28 = arith.mulf %27, %24 : vector<1x32xf32>
      %29 = arith.select %26, %24, %28 : vector<1x32xi1>, vector<1x32xf32>
      %c0_24 = arith.constant 0 : index
      %c0_25 = arith.constant 0 : index
      %30 = vector.load %arg7[%c0_24, %c0_25] : memref<32x8xf32, #tpu.memory_space<vmem>>, vector<32x8xf32>
      %cst_26 = arith.constant dense<0.000000e+00> : vector<1x8xf32>
      %31 = tpu.matmul %29, %30, %cst_26 {dimension_numbers = #tpu.dot_dimension_numbers<[1], [0], [0], [1], [0, 0, 1, 1], [], []>} : vector<1x32xf32>, vector<32x8xf32>, vector<1x8xf32> -> vector<1x8xf32>
      %c0_27 = arith.constant 0 : index
      %c0_28 = arith.constant 0 : index
      %32 = vector.load %arg8[%c0_27, %c0_28] : memref<1x8xf32, #tpu.memory_space<vmem>>, vector<1x8xf32>
      %33 = arith.addf %31, %32 : vector<1x8xf32>
      %c0_29 = arith.constant 0 : index
      %c0_30 = arith.constant 0 : index
      %c0_31 = arith.constant 0 : index
      %34 = vector.load %arg9[%c0_29, %c0_30, %c0_31] : memref<1x1x8xf32, #tpu.memory_space<vmem>>, vector<1x1x8xf32>
      %35 = vector.shape_cast %34 : vector<1x1x8xf32> to vector<1x8xf32>
      %36 = vector.shape_cast %33 : vector<1x8xf32> to vector<1x1x8xf32>
      tpu.vector_store %arg9[%c0_29, %c0_30, %c0_31], %36 {strides = array<i32>} : memref<1x1x8xf32, #tpu.memory_space<vmem>>, vector<1x1x8xf32>,
    } else {
    }
    return
  }
  func.func @transform_0(%arg0: i32, %arg1: i32) -> (i32, i32, i32) {
    %c0_i32 = arith.constant 0 : i32
    %c0_i32_0 = arith.constant 0 : i32
    return %arg0, %c0_i32, %arg1 : i32, i32, i32
  }
  func.func @transform_1(%arg0: i32, %arg1: i32) -> (i32, i32) {
    %c0_i32 = arith.constant 0 : i32
    %c0_i32_0 = arith.constant 0 : i32
    %c0_i32_1 = arith.constant 0 : i32
    return %c0_i32, %c0_i32_0 : i32, i32
  }
  func.func @transform_2(%arg0: i32, %arg1: i32) -> (i32, i32) {
    %c0_i32 = arith.constant 0 : i32
    %c0_i32_0 = arith.constant 0 : i32
    %c0_i32_1 = arith.constant 0 : i32
    return %c0_i32, %c0_i32_0 : i32, i32
  }
  func.func @transform_3(%arg0: i32, %arg1: i32) -> (i32, i32) {
    %c0_i32 = arith.constant 0 : i32
    %c0_i32_0 = arith.constant 0 : i32
    %c0_i32_1 = arith.constant 0 : i32
    return %c0_i32, %c0_i32_0 : i32, i32
  }
  func.func @transform_4(%arg0: i32, %arg1: i32) -> (i32, i32) {
    %c0_i32 = arith.constant 0 : i32
    %c0_i32_0 = arith.constant 0 : i32
    %c0_i32_1 = arith.constant 0 : i32
    return %c0_i32, %c0_i32_0 : i32, i32
  }
  func.func @transform_5(%arg0: i32, %arg1: i32) -> (i32, i32) {
    %c0_i32 = arith.constant 0 : i32
    %c0_i32_0 = arith.constant 0 : i32
    %c0_i32_1 = arith.constant 0 : i32
    return %c0_i32, %c0_i32_0 : i32, i32
  }
  func.func @transform_6(%arg0: i32, %arg1: i32) -> (i32, i32) {
    %c0_i32 = arith.constant 0 : i32
    %c0_i32_0 = arith.constant 0 : i32
    %c0_i32_1 = arith.constant 0 : i32
    return %c0_i32, %c0_i32_0 : i32, i32
  }
  func.func @transform_7(%arg0: i32, %arg1: i32) -> (i32, i32, i32) {
    %c0_i32 = arith.constant 0 : i32
    %c0_i32_0 = arith.constant 0 : i32
    %c0_i32_1 = arith.constant 0 : i32
    return %arg0, %c0_i32, %c0_i32_0 : i32, i32, i32
  }
}

</mosaic_0001>

<llo_original>
// kernel: mapping_network_forward.1
$region0: #{mapping_network_forward.1}
  #allocation0 [shape = 'u32[]', space=smem, size = 0x4, offset = 0x4, fixed_abs, tag = 'smem constant byte address 0x4 - core index']
  #allocation1 [shape = 'u32[72,128]{1,0:T(1,128)}', space=vmem, size = 0x9000, scoped, tag = 'internal scratch']
  #allocation2 [shape = 'f32[1,4]{1,0:T(1,128)}', space=vmem, size = 0x200, scoped, tag = 'scratch operand']
  %s0 = inlined_call_operand.vmem [shape: f32[2,4,256], index: 0, kind: input, shape index: {}]
  %s1 = inlined_call_operand.vmem [shape: f32[4,32], index: 1, kind: input, shape index: {}]
  %s2 = inlined_call_operand.vmem [shape: f32[1,32], index: 2, kind: input, shape index: {}]
  %s3 = inlined_call_operand.vmem [shape: f32[32,32], index: 3, kind: input, shape index: {}]
  %s4 = inlined_call_operand.vmem [shape: f32[1,32], index: 4, kind: input, shape index: {}]
  %s5 = inlined_call_operand.vmem [shape: f32[32,8], index: 5, kind: input, shape index: {}]
  %s6 = inlined_call_operand.vmem [shape: f32[1,8], index: 6, kind: input, shape index: {}]
  %s7 = inlined_call_operand.hbm [shape: f32[2,1,8], index: 7, kind: output, shape index: {}]
  %s8 = sld [smem:[#allocation0]]
  $region69: #{mapping_network_forward.1} parent=0
    _
  %s10 = ssub.s32 1, %s8
  %s11 = scalar_select 0, %s10, %s8
  $region1: #{mapping_network_forward.1} parent=0
    #allocation3 [shape = 'u8[1024]{0}', space=vmem, size = 0x400, scoped, tag = 'output window, operand 0']
    #allocation4 [shape = 's32[2]{0}', space=sflag, size = 0x8, scoped, tag = 'scoped memory for mapping_network_forward.1']
    %12 = vsyncpa [#allocation4], 0
    %s13 = scalar_lea.sflag [#allocation4], 1
    %14 = vsyncpa %s13, 0
    loop: start=0, step=1, limit=6
    $region2: #{mapping_network_forward.1} parent=1 // loop_pre_header
      _
    $region3: #{mapping_network_forward.1} parent=1 // loop_header
      %s16 = sphi 0, %s20
      %p17 = scmp.ge.s32.totalorder %s16, 6
      %s23 = sphi 0, %s35
      %s24 = sphi 0, %s31
      %s25 = sphi 0, %s23
      %s26 = sphi 0, %s24
      %s27 = sphi 0, %s25
      %s28 = sphi 0, %s26
      %s40 = sphi 0, %s42
      %s43 = sphi 0, %s40
      %s44 = sphi 0, %s43
      %s60 = sphi 0, %s44
      %s64 = sphi 0, %s64
      %s66 = sphi 0, %s64
      %s67 = sphi 0, %s66
      %s81 = sphi 0, %s67
      %s85 = sphi 0, %s85
      %s87 = sphi 0, %s85
      %s88 = sphi 0, %s87
      %s102 = sphi 0, %s88
      %s106 = sphi 0, %s106
      %s108 = sphi 0, %s106
      %s109 = sphi 0, %s108
      %s123 = sphi 0, %s109
      %s127 = sphi 0, %s127
      %s129 = sphi 0, %s127
      %s130 = sphi 0, %s129
      %s144 = sphi 0, %s130
      %s148 = sphi 0, %s148
      %s150 = sphi 0, %s148
      %s151 = sphi 0, %s150
      %s165 = sphi 0, %s151
      %s169 = sphi 0, %s169
      %s171 = sphi 0, %s169
      %s172 = sphi 0, %s171
      %s186 = sphi 0, %s172
      %s192 = sphi 0, %s194
      %s195 = sphi 0, %s192
      %s196 = sphi 0, %s195
      %s212 = sphi 0, %s196
    $region4: #{mapping_network_forward.1} parent=1 // loop_header_branch
      %19 = sbr.rel (%p17) target = $region8
    $region5: #{mapping_network_forward.1} parent=1 // loop_body
      %s21 = ssub.s32 %s16, 1
      %s22 = ssub.s32 %s16, 2
      %s29 = sadd.s32 1, %s24
      %p30 = scmp.ge.s32.totalorder %s29, 2
      %s31 = scalar_select %p30, 0, %s29
      %s32 = sadd.s32 1, %s23
      %s33 = scalar_select %p30, %s32, %s23
      %p34 = scmp.ge.s32.totalorder %s33, 2
      %s35 = scalar_select %p34, 0, %s33
      %s36 = ssub.s32 %s23, %s35
      %s37 = ssub.s32 %s24, %s31
      %s38 = sor.u32 %s36, %s37
      %p39 = scmp.eq.s32.totalorder %s38, 0
      %s41 = sadd.s32 %s40, 1
      %s42 = scalar_select %p39, %s40, %s41
      %p45 = pneg %p39
      %p46 = scmp.eq.s32.totalorder %s16, 3
      %p47 = por %p45, %p46
      %p48 = scmp.ne.s32.totalorder %s40, %s43
      %p49 = scmp.eq.s32.totalorder %s16, 0
      %p50 = por %p48, %p49
      %p51 = scmp.ne.s32.totalorder %s40, %s43
      %p52 = scmp.eq.s32.totalorder %s21, 3
      %p53 = por %p51, %p52
      %p54 = scmp.ne.s32.totalorder %s43, %s44
      %p55 = scmp.eq.s32.totalorder %s21, 0
      %p56 = por %p54, %p55
      %p57 = scmp.ne.s32.totalorder %s43, %s44
      %p58 = scmp.eq.s32.totalorder %s22, 3
      %p59 = por %p57, %p58
      %p61 = scmp.ne.s32.totalorder %s44, %s60
      %p62 = scmp.eq.s32.totalorder %s22, 0
      %p63 = por %p61, %p62
      %s65 = sadd.s32 %s64, 1
      %p68 = scmp.eq.s32.totalorder %s16, 3
      %p69 = scmp.ne.s32.totalorder %s64, %s66
      %p70 = scmp.eq.s32.totalorder %s16, 0
      %p71 = por %p69, %p70
      %p72 = scmp.ne.s32.totalorder %s64, %s66
      %p73 = scmp.eq.s32.totalorder %s21, 3
      %p74 = por %p72, %p73
      %p75 = scmp.ne.s32.totalorder %s66, %s67
      %p76 = scmp.eq.s32.totalorder %s21, 0
      %p77 = por %p75, %p76
      %p78 = scmp.ne.s32.totalorder %s66, %s67
      %p79 = scmp.eq.s32.totalorder %s22, 3
      %p80 = por %p78, %p79
      %p82 = scmp.ne.s32.totalorder %s67, %s81
      %p83 = scmp.eq.s32.totalorder %s22, 0
      %p84 = por %p82, %p83
      %s86 = sadd.s32 %s85, 1
      %p89 = scmp.eq.s32.totalorder %s16, 3
      %p90 = scmp.ne.s32.totalorder %s85, %s87
      %p91 = scmp.eq.s32.totalorder %s16, 0
      %p92 = por %p90, %p91
      %p93 = scmp.ne.s32.totalorder %s85, %s87
      %p94 = scmp.eq.s32.totalorder %s21, 3
      %p95 = por %p93, %p94
      %p96 = scmp.ne.s32.totalorder %s87, %s88
      %p97 = scmp.eq.s32.totalorder %s21, 0
      %p98 = por %p96, %p97
      %p99 = scmp.ne.s32.totalorder %s87, %s88
      %p100 = scmp.eq.s32.totalorder %s22, 3
      %p101 = por %p99, %p100
      %p103 = scmp.ne.s32.totalorder %s88, %s102
      %p104 = scmp.eq.s32.totalorder %s22, 0
      %p105 = por %p103, %p104
      %s107 = sadd.s32 %s106, 1
      %p110 = scmp.eq.s32.totalorder %s16, 3
      %p111 = scmp.ne.s32.totalorder %s106, %s108
      %p112 = scmp.eq.s32.totalorder %s16, 0
      %p113 = por %p111, %p112
      %p114 = scmp.ne.s32.totalorder %s106, %s108
      %p115 = scmp.eq.s32.totalorder %s21, 3
      %p116 = por %p114, %p115
      %p117 = scmp.ne.s32.totalorder %s108, %s109
      %p118 = scmp.eq.s32.totalorder %s21, 0
      %p119 = por %p117, %p118
      %p120 = scmp.ne.s32.totalorder %s108, %s109
      %p121 = scmp.eq.s32.totalorder %s22, 3
      %p122 = por %p120, %p121
      %p124 = scmp.ne.s32.totalorder %s109, %s123
      %p125 = scmp.eq.s32.totalorder %s22, 0
      %p126 = por %p124, %p125
      %s128 = sadd.s32 %s127, 1
      %p131 = scmp.eq.s32.totalorder %s16, 3
      %p132 = scmp.ne.s32.totalorder %s127, %s129
      %p133 = scmp.eq.s32.totalorder %s16, 0
      %p134 = por %p132, %p133
      %p135 = scmp.ne.s32.totalorder %s127, %s129
      %p136 = scmp.eq.s32.totalorder %s21, 3
      %p137 = por %p135, %p136
      %p138 = scmp.ne.s32.totalorder %s129, %s130
      %p139 = scmp.eq.s32.totalorder %s21, 0
      %p140 = por %p138, %p139
      %p141 = scmp.ne.s32.totalorder %s129, %s130
      %p142 = scmp.eq.s32.totalorder %s22, 3
      %p143 = por %p141, %p142
      %p145 = scmp.ne.s32.totalorder %s130, %s144
      %p146 = scmp.eq.s32.totalorder %s22, 0
      %p147 = por %p145, %p146
      %s149 = sadd.s32 %s148, 1
      %p152 = scmp.eq.s32.totalorder %s16, 3
      %p153 = scmp.ne.s32.totalorder %s148, %s150
      %p154 = scmp.eq.s32.totalorder %s16, 0
      %p155 = por %p153, %p154
      %p156 = scmp.ne.s32.totalorder %s148, %s150
      %p157 = scmp.eq.s32.totalorder %s21, 3
      %p158 = por %p156, %p157
      %p159 = scmp.ne.s32.totalorder %s150, %s151
      %p160 = scmp.eq.s32.totalorder %s21, 0
      %p161 = por %p159, %p160
      %p162 = scmp.ne.s32.totalorder %s150, %s151
      %p163 = scmp.eq.s32.totalorder %s22, 3
      %p164 = por %p162, %p163
      %p166 = scmp.ne.s32.totalorder %s151, %s165
      %p167 = scmp.eq.s32.totalorder %s22, 0
      %p168 = por %p166, %p167
      %s170 = sadd.s32 %s169, 1
      %p173 = scmp.eq.s32.totalorder %s16, 3
      %p174 = scmp.ne.s32.totalorder %s169, %s171
      %p175 = scmp.eq.s32.totalorder %s16, 0
      %p176 = por %p174, %p175
      %p177 = scmp.ne.s32.totalorder %s169, %s171
      %p178 = scmp.eq.s32.totalorder %s21, 3
      %p179 = por %p177, %p178
      %p180 = scmp.ne.s32.totalorder %s171, %s172
      %p181 = scmp.eq.s32.totalorder %s21, 0
      %p182 = por %p180, %p181
      %p183 = scmp.ne.s32.totalorder %s171, %s172
      %p184 = scmp.eq.s32.totalorder %s22, 3
      %p185 = por %p183, %p184
      %p187 = scmp.ne.s32.totalorder %s172, %s186
      %p188 = scmp.eq.s32.totalorder %s22, 0
      %p189 = por %p187, %p188
      %s190 = ssub.s32 %s23, %s35
      %p191 = scmp.eq.s32.totalorder %s190, 0
      %s193 = sadd.s32 %s192, 1
      %s194 = scalar_select %p191, %s192, %s193
      %p197 = pneg %p191
      %p198 = scmp.eq.s32.totalorder %s16, 3
      %p199 = por %p197, %p198
      %p200 = scmp.ne.s32.totalorder %s192, %s195
      %p201 = scmp.eq.s32.totalorder %s16, 0
      %p202 = por %p200, %p201
      %p203 = scmp.ne.s32.totalorder %s192, %s195
      %p204 = scmp.eq.s32.totalorder %s21, 3
      %p205 = por %p203, %p204
      %p206 = scmp.ne.s32.totalorder %s195, %s196
      %p207 = scmp.eq.s32.totalorder %s21, 0
      %p208 = por %p206, %p207
      %p209 = scmp.ne.s32.totalorder %s195, %s196
      %p210 = scmp.eq.s32.totalorder %s22, 3
      %p211 = por %p209, %p210
      %p213 = scmp.ne.s32.totalorder %s196, %s212
      %p214 = scmp.eq.s32.totalorder %s22, 0
      %p215 = por %p213, %p214
      %p216 = scmp.le.s32.totalorder 1, %s16
      %p217 = scmp.lt.s32.totalorder %s16, 5
      %p218 = pnand %p216, %p217
      %p219 = pneg %p218
      // Predicated region
      $region9: #{mapping_network_forward.1} parent=5 // pred_check
        _
      $region10: #{mapping_network_forward.1} parent=5 // pred_check_branch
        %221 = sbr.rel (%p218) target = $region12
      $region11: #{mapping_network_forward.1} parent=5 // pred_region
        %s222 = ssub.s32 %s16, 1
        // Predicated region
        $region13: #{mapping_network_forward.1} parent=11 // pred_check
          %p223 = pneg %p77
        $region14: #{mapping_network_forward.1} parent=11 // pred_check_branch
          %225 = sbr.rel (%p223) target = $region16
        $region15: #{mapping_network_forward.1} parent=11 // pred_region
          _
        $region16: #{mapping_network_forward.1} parent=11 // pred_fallthru
          _
        // Predicated region
        $region17: #{mapping_network_forward.1} parent=11 // pred_check
          %p226 = pneg %p98
        $region18: #{mapping_network_forward.1} parent=11 // pred_check_branch
          %228 = sbr.rel (%p226) target = $region20
        $region19: #{mapping_network_forward.1} parent=11 // pred_region
          _
        $region20: #{mapping_network_forward.1} parent=11 // pred_fallthru
          _
        // Predicated region
        $region21: #{mapping_network_forward.1} parent=11 // pred_check
          %p229 = pneg %p119
        $region22: #{mapping_network_forward.1} parent=11 // pred_check_branch
          %231 = sbr.rel (%p229) target = $region24
        $region23: #{mapping_network_forward.1} parent=11 // pred_region
          _
        $region24: #{mapping_network_forward.1} parent=11 // pred_fallthru
          _
        // Predicated region
        $region25: #{mapping_network_forward.1} parent=11 // pred_check
          %p232 = pneg %p140
        $region26: #{mapping_network_forward.1} parent=11 // pred_check_branch
          %234 = sbr.rel (%p232) target = $region28
        $region27: #{mapping_network_forward.1} parent=11 // pred_region
          _
        $region28: #{mapping_network_forward.1} parent=11 // pred_fallthru
          _
        // Predicated region
        $region29: #{mapping_network_forward.1} parent=11 // pred_check
          %p235 = pneg %p161
        $region30: #{mapping_network_forward.1} parent=11 // pred_check_branch
          %237 = sbr.rel (%p235) target = $region32
        $region31: #{mapping_network_forward.1} parent=11 // pred_region
          _
        $region32: #{mapping_network_forward.1} parent=11 // pred_fallthru
          _
        // Predicated region
        $region33: #{mapping_network_forward.1} parent=11 // pred_check
          %p238 = pneg %p182
        $region34: #{mapping_network_forward.1} parent=11 // pred_check_branch
          %240 = sbr.rel (%p238) target = $region36
        $region35: #{mapping_network_forward.1} parent=11 // pred_region
          _
        $region36: #{mapping_network_forward.1} parent=11 // pred_fallthru
          _
      $region12: #{mapping_network_forward.1} parent=5 // pred_fallthru
        _
      %p241 = scmp.lt.s32.totalorder %s16, 4
      // Predicated region
      $region37: #{mapping_network_forward.1} parent=5 // pred_check
        %p242 = pneg %p241
      $region38: #{mapping_network_forward.1} parent=5 // pred_check_branch
        %244 = sbr.rel (%p242) target = $region40
      $region39: #{mapping_network_forward.1} parent=5 // pred_region
        // Predicated region
        $region41: #{mapping_network_forward.1} parent=39 // pred_check
          %p245 = pneg %p50
        $region42: #{mapping_network_forward.1} parent=39 // pred_check_branch
          %247 = sbr.rel (%p245) target = $region44
        $region43: #{mapping_network_forward.1} parent=39 // pred_region
          %p248 = scmp.lt.s32.totalorder %s23, 1
          %s249 = scalar_select %p248, %s23, 1
          %p250 = scmp.lt.s32.totalorder %s24, 1
          %s251 = scalar_select %p250, %s24, 1
          %s252 = smul.addr %s249, 2
          %s253 = sadd.s32 %s251, %s252
          %s254 = smul.addr %s253, 4
          %s255 = scalar_lea.vmem %s0, %s254
        $region44: #{mapping_network_forward.1} parent=39 // pred_fallthru
          _
      $region40: #{mapping_network_forward.1} parent=5 // pred_fallthru
        _
      %p256 = scmp.le.s32.totalorder 1, %s16
      %p257 = scmp.lt.s32.totalorder %s16, 5
      %p258 = pnand %p256, %p257
      %p259 = pneg %p258
      // Predicated region
      $region45: #{mapping_network_forward.1} parent=5 // pred_check
        _
      $region46: #{mapping_network_forward.1} parent=5 // pred_check_branch
        %261 = sbr.rel (%p258) target = $region48
      $region47: #{mapping_network_forward.1} parent=5 // pred_region
        %s262 = ssub.s32 %s16, 1
        %p263 = scmp.lt.s32.totalorder %s25, 1
        %s264 = scalar_select %p263, %s25, 1
        %p265 = scmp.lt.s32.totalorder %s26, 1
        %s266 = scalar_select %p265, %s26, 1
        %s267 = smul.addr %s264, 2
        %s268 = sadd.s32 %s266, %s267
        %s269 = smul.addr %s268, 4
        %s270 = scalar_lea.vmem %s0, %s269
        %p271 = pneg %p56
        %p272 = pneg %p53
        %p273 = pneg %p77
        %p274 = pneg %p74
        %p275 = pneg %p98
        %p276 = pneg %p95
        %p277 = pneg %p119
        %p278 = pneg %p116
        %p279 = pneg %p140
        %p280 = pneg %p137
        %p281 = pneg %p161
        %p282 = pneg %p158
        %p283 = pneg %p182
        %p284 = pneg %p179
        %p285 = pneg %p208
        %p286 = pneg %p205
        %s287 = sand.u32 %s195, 1
        %s288 = scalar_lea.sflag [#allocation4], %s287
        %s289 = sand.u32 %s195, 1
        %s290 = scalar_lea.vmem [#allocation3], %s289
        %p291 = scmp.lt.s32.totalorder %s25, 1
        %s292 = scalar_select %p291, %s25, 1
        %p293 = scmp.lt.s32.totalorder %s26, 1
        %s294 = scalar_select %p293, %s26, 1
        %s295 = smul.addr %s292, 2
        %s296 = sadd.s32 %s294, %s295
        %s297 = smul.addr %s296, 4
        %s298 = scalar_lea.vmem %s0, %s297
        %p299 = scmp.eq.s32.totalorder %s26, 0
        // Predicated region
        $region49: #{mapping_network_forward.1} parent=47 // pred_check
          %p300 = pneg %p299
        $region50: #{mapping_network_forward.1} parent=47 // pred_check_branch
          %302 = sbr.rel (%p300) target = $region52
        $region51: #{mapping_network_forward.1} parent=47 // pred_region
          %vm303 = vcmask 24576
          %304 = vst.msk [vmem:[#allocation2] sm:$0x1] %vm303, 0.0
        $region52: #{mapping_network_forward.1} parent=47 // pred_fallthru
          _
        %v305 = vld [vmem:[%s298] sm:$0xf]
        %v306 = vld [vmem:[#allocation2] sm:$0x1]
        %vm307 = vcmask 1043456
        %v308 = vsel %vm307, %v305, 0.0
        %309 = vadd.xlane.f32.xlu0 %v308
        %v310 = vpop.xlane.xlu0 %309
        %v312 = vperm.slane %v310, 0
        %v313 = vperm.slane %v310, 1
        %v314 = vperm.slane %v310, 2
        %v315 = vperm.slane %v310, 3
        %316 = vst [vmem:[#allocation1] ss:$9 sm:$0xff] %v312
        %s317 = scalar_lea.vmem [#allocation1], 1
        %318 = vst [vmem:[%s317] ss:$9 sm:$0xff] %v313
        %s319 = scalar_lea.vmem [#allocation1], 2
        %320 = vst [vmem:[%s319] ss:$9 sm:$0xff] %v314
        %s321 = scalar_lea.vmem [#allocation1], 3
        %322 = vst [vmem:[%s321] ss:$9 sm:$0xff] %v315
        %v323 = vld [vmem:[#allocation1] sm:$0xff]
        %324 = vset.pattern.permute.xlu0 0
        %325 = vperm.xlu0 %324, %v323
        %v326 = vpop.permute.xlu0 %325
        %v327 = vlaneseq
        %v328 = vand.u32 %v327, 127
        %v329 = vperm.slane %v326, %v328
        %v331 = vadd.f32 %v306, %v329
        %vm332 = vcmask 24576
        %333 = vst.msk [vmem:[#allocation2] sm:$0x1] %vm332, %v331
        %p334 = scmp.eq.s32.totalorder %s26, 1
        // Predicated region
        $region53: #{mapping_network_forward.1} parent=47 // pred_check
          %p335 = pneg %p334
        $region54: #{mapping_network_forward.1} parent=47 // pred_check_branch
          %337 = sbr.rel (%p335) target = $region56
        $region55: #{mapping_network_forward.1} parent=47 // pred_region
          %v338 = vld [vmem:[#allocation2] sm:$0x1]
          %v339 = vld [vmem:[%s1] sm:$0xf]
          %v340 = vld [vmem:[%s2] sm:$0x1]
          %vm341 = vcmask 31744
          %v343 = vsel %vm341, %v338, 0
          %v346 = vsel %vm307, %v339, 0
          %348 = vmatpush.msra.mxu0 0.0
          %349 = vmatpush.msra.mxu0 0.0
          %350 = vmatpush.msra.mxu0 0.0
          %351 = vmatpush.msra.mxu0 0.0
          %352 = vmatpush.msra.mxu0 0.0
          %353 = vmatpush.msra.mxu0 0.0
          %354 = vmatpush.msra.mxu0 0.0
          %355 = vmatpush.msra.mxu0 0.0
          %356 = vmatpush.msra.mxu0 0.0
          %357 = vmatpush.msra.mxu0 0.0
          %358 = vmatpush.msra.mxu0 0.0
          %359 = vmatpush.msra.mxu0 0.0
          %360 = vmatpush.msra.mxu0 0.0
          %361 = vmatpush.msra.mxu0 0.0
          %362 = vmatpush.msra.mxu0 0.0
          %363 = vmatpush.msra.mxu0 %v346
          %364 = vmatmul.f32.gmra.mxu0 %v343
          %v365 = vpop.f32.mrf.mxu0
          %v366 = vadd.f32 %v340, %v365
          %367 = vdwg.mxu0
          %vm368 = vcmp.gt.f32.partialorder %v366, 0.0
          %v369 = vmul.f32 %v366, 0.2
          %v370 = vsel %vm368, %v366, %v369
          %v371 = vld [vmem:[%s3] sm:$0xff]
          %v372 = vld [vmem:[%s3 + $0x8] sm:$0xff]
          %v373 = vld [vmem:[%s3 + $0x10] sm:$0xff]
          %v374 = vld [vmem:[%s3 + $0x18] sm:$0xff]
          %v375 = vld [vmem:[%s4] sm:$0x1]
          %vm376 = vcmask 261120
          %v378 = vsel %vm376, %v370, 0
          %380 = vmatpush.msra.mxu0 0.0
          %381 = vmatpush.msra.mxu0 0.0
          %382 = vmatpush.msra.mxu0 0.0
          %383 = vmatpush.msra.mxu0 0.0
          %384 = vmatpush.msra.mxu0 0.0
          %385 = vmatpush.msra.mxu0 0.0
          %386 = vmatpush.msra.mxu0 0.0
          %387 = vmatpush.msra.mxu0 0.0
          %388 = vmatpush.msra.mxu0 0.0
          %389 = vmatpush.msra.mxu0 0.0
          %390 = vmatpush.msra.mxu0 0.0
          %391 = vmatpush.msra.mxu0 0.0
          %392 = vmatpush.msra.mxu0 %v374
          %393 = vmatpush.msra.mxu0 %v373
          %394 = vmatpush.msra.mxu0 %v372
          %395 = vmatpush.msra.mxu0 %v371
          %396 = vmatmul.f32.gmra.mxu0 %v378
          %v397 = vpop.f32.mrf.mxu0
          %v398 = vadd.f32 %v375, %v397
          %399 = vdwg.mxu0
          %vm400 = vcmp.gt.f32.partialorder %v398, 0.0
          %v401 = vmul.f32 %v398, 0.2
          %v402 = vsel %vm400, %v398, %v401
          %v403 = vld [vmem:[%s5] sm:$0xff]
          %v404 = vld [vmem:[%s5 + $0x8] sm:$0xff]
          %v405 = vld [vmem:[%s5 + $0x10] sm:$0xff]
          %v406 = vld [vmem:[%s5 + $0x18] sm:$0xff]
          %v407 = vld [vmem:[%s6] sm:$0x1]
          %v409 = vsel %vm376, %v402, 0
          %411 = vmatpush.msra.mxu0 0.0
          %412 = vmatpush.msra.mxu0 0.0
          %413 = vmatpush.msra.mxu0 0.0
          %414 = vmatpush.msra.mxu0 0.0
          %415 = vmatpush.msra.mxu0 0.0
          %416 = vmatpush.msra.mxu0 0.0
          %417 = vmatpush.msra.mxu0 0.0
          %418 = vmatpush.msra.mxu0 0.0
          %419 = vmatpush.msra.mxu0 0.0
          %420 = vmatpush.msra.mxu0 0.0
          %421 = vmatpush.msra.mxu0 0.0
          %422 = vmatpush.msra.mxu0 0.0
          %423 = vmatpush.msra.mxu0 %v406
          %424 = vmatpush.msra.mxu0 %v405
          %425 = vmatpush.msra.mxu0 %v404
          %426 = vmatpush.msra.mxu0 %v403
          %427 = vmatmul.f32.gmra.mxu0 %v409
          %v428 = vpop.f32.mrf.mxu0
          %v429 = vadd.f32 %v407, %v428
          %430 = vdwg.mxu0
          %vm431 = vcmask 57344
          %432 = vst.msk [vmem:[%s290] sm:$0x1] %vm431, %v429
        $region56: #{mapping_network_forward.1} parent=47 // pred_fallthru
          _
        %s433 = sand.u32 %s195, 1
        %s434 = scalar_lea.sflag [#allocation4], %s433
        %s435 = sand.u32 %s195, 1
        %s436 = scalar_lea.vmem [#allocation3], %s435
        // Predicated region
        $region57: #{mapping_network_forward.1} parent=47 // pred_check
          %p437 = pneg %p205
        $region58: #{mapping_network_forward.1} parent=47 // pred_check_branch
          %439 = sbr.rel (%p437) target = $region60
        $region59: #{mapping_network_forward.1} parent=47 // pred_region
          %441 = vsyncadd %s434, 0
          %s442 = scalar_lea.hbm %s7, %s25
          %s444 = sshll.u32 %s436, 4
          %s445 = int_to_ptr.vmem [resolvable:$true] %s444
          %s446 = sshll.u32 %s442, 4
          %s447 = int_to_ptr.hbm [resolvable:$true] %s446
          %449 = dma.vmem_to_hbm [thread:$0]  %s445, 16, %s447, %s434
        $region60: #{mapping_network_forward.1} parent=47 // pred_fallthru
          _
      $region48: #{mapping_network_forward.1} parent=5 // pred_fallthru
        _
      %p450 = scmp.le.s32.totalorder 2, %s16
      // Predicated region
      $region61: #{mapping_network_forward.1} parent=5 // pred_check
        %p451 = pneg %p450
      $region62: #{mapping_network_forward.1} parent=5 // pred_check_branch
        %453 = sbr.rel (%p451) target = $region64
      $region63: #{mapping_network_forward.1} parent=5 // pred_region
        %s454 = ssub.s32 %s16, 2
        // Predicated region
        $region65: #{mapping_network_forward.1} parent=63 // pred_check
          %p455 = pneg %p211
        $region66: #{mapping_network_forward.1} parent=63 // pred_check_branch
          %457 = sbr.rel (%p455) target = $region68
        $region67: #{mapping_network_forward.1} parent=63 // pred_region
          %s458 = sand.u32 %s196, 1
          %s459 = scalar_lea.sflag [#allocation4], %s458
          %s460 = sand.u32 %s196, 1
          %s461 = scalar_lea.vmem [#allocation3], %s460
          %463 = dma.done %s459, 16
        $region68: #{mapping_network_forward.1} parent=63 // pred_fallthru
          _
      $region64: #{mapping_network_forward.1} parent=5 // pred_fallthru
        _
    $region6: #{mapping_network_forward.1} parent=1 // loop_footer
      %s20 = sadd.s32 1, %s16
    $region7: #{mapping_network_forward.1} parent=1 // loop_footer_branch
      %15 = sbr.rel target = $region3
    $region8: #{mapping_network_forward.1} parent=1 // loop_exit
      _
    %464 = vsyncpa [#allocation4], 1
    %s465 = scalar_lea.sflag [#allocation4], 1
    %466 = vsyncpa %s465, 1

</llo_original>
